<compile_context>
chip_gen: v6e
topology: v6e:2x2x1
jax: 0.10.0
libtpu: 0.0.40
codegen_flags: <defaults>
</compile_context>

<pallas_src>
import functools

import jax
import jax.numpy as jnp
from jax.experimental import pallas as pl
from jax.experimental.pallas import tpu as pltpu

KSIZE = 3   # temporal kernel size used by the module
PAD = 1     # Conv2d padding=(0,1), padding_mode='reflect'


def _round_up(x, m):
    return ((x + m - 1) // m) * m


def timeblock_kernel(x_ref, w_ref, b_ref, o_ref, *, t_cout):
    # x_ref: (R, (T+2)*Cin)  w_ref: ((T+2)*Cin, 3*T*Cout)  b_ref: (1, 3*T*Cout)
    x = x_ref[...]
    y = jnp.dot(x, w_ref[...], preferred_element_type=jnp.float32) + b_ref[...]
    y1 = y[:, :t_cout]               # conv1
    y2 = y[:, t_cout:2 * t_cout]     # conv2 (sigmoid gate)
    y3 = y[:, 2 * t_cout:]           # conv3
    out = jnp.maximum(y1 + jax.nn.sigmoid(y2) + y3, 0.0)
    o_ref[...] = out.astype(o_ref.dtype)


def _build_fused_weight(w1, w2, w3, t_out):
    # PyTorch Conv2d weights (Cout, Cin, 1, K) -> banded matmul weight
    #   Wbig[(t+k)*Cin + i, c*T*Cout + t*Cout + o] = w_c[o, i, 0, k]
    Cout, Cin, _, K = w1.shape
    P = t_out + K - 1
    # (3, K, Cin, Cout): dims (conv, tap, in_ch, out_ch)
    wtaps = jnp.stack(
        [jnp.transpose(w[:, :, 0, :], (2, 1, 0)) for w in (w1, w2, w3)], axis=0)
    # E[k, p, t] = 1 iff p == t + k  (place tap k on its diagonal band)
    eye = jnp.stack(
        [jnp.eye(P, t_out, k=-k, dtype=w1.dtype) for k in range(K)], axis=0)
    wbig = jnp.einsum("kpt,ckio->picto", eye, wtaps)
    return wbig.reshape(P * Cin, 3 * t_out * Cout)


def _build_fused_bias(b1, b2, b3, t_out):
    return jnp.concatenate([jnp.tile(b, t_out) for b in (b1, b2, b3)]).reshape(1, -1)


def time_block(X, w1, b1, w2, b2, w3, b3, *, tile_rows=1024):
    B, N, T, Cin = X.shape
    Cout, _, _, K = w1.shape
    P = T + 2 * PAD
    T_out = P - K + 1            # == T for kernel_size=3, reflect pad 1

    # reflect padding along time (needs T >= 2), then a FREE contiguous reshape
    Xp = jnp.pad(X, ((0, 0), (0, 0), (PAD, PAD), (0, 0)), mode="reflect")
    Xf = Xp.reshape(B * N, P * Cin)                       # (B*N, (T+2)*Cin)

    Wbig = _build_fused_weight(w1, w2, w3, T_out)         # (P*Cin, 3*T_out*Cout)
    Bbig = _build_fused_bias(b1, b2, b3, T_out)           # (1, 3*T_out*Cout)

    M = B * N
    R = min(tile_rows, _round_up(M, 8))                   # row tile (multiple of 8)
    Mpad = _round_up(M, R)
    if Mpad != M:
        Xf = jnp.pad(Xf, ((0, Mpad - M), (0, 0)))

    out_w = T_out * Cout
    out = pl.pallas_call(
        functools.partial(timeblock_kernel, t_cout=out_w),
        out_shape=jax.ShapeDtypeStruct((Mpad, out_w), X.dtype),
        grid_spec=pltpu.PrefetchScalarGridSpec(
            num_scalar_prefetch=0,
            grid=(Mpad // R,),
            in_specs=[
                pl.BlockSpec((R, P * Cin), lambda i: (i, 0)),
                # constant index_maps -> fetched once, stay resident in VMEM
                pl.BlockSpec((P * Cin, 3 * out_w), lambda i: (0, 0)),
                pl.BlockSpec((1, 3 * out_w), lambda i: (0, 0)),
            ],
            out_specs=pl.BlockSpec((R, out_w), lambda i: (i, 0)),
        ),
        compiler_params=pltpu.CompilerParams(
            dimension_semantics=("parallel",),
        ),
    )(Xf, Wbig, Bbig)

    return out[:M].reshape(B, N, T_out, Cout)


def time_block_reference(X, w1, b1, w2, b2, w3, b3):
    # Pure-JAX reference of the PyTorch forward (for correctness check).
    T = X.shape[2]
    Xp = jnp.pad(X, ((0, 0), (0, 0), (1, 1), (0, 0)), mode="reflect")
    cols = jnp.stack([Xp[:, :, k:k + T, :] for k in range(KSIZE)], axis=3)  # (B,N,T,K,Cin)

    def conv(w, b):
        return jnp.einsum("bntki,oik->bnto", cols, w[:, :, 0, :]) + b

    y1, y2, y3 = conv(w1, b1), conv(w2, b2), conv(w3, b3)
    return jnp.maximum(y1 + jax.nn.sigmoid(y2) + y3, 0.0)


if __name__ == "__main__":
    B, N, T = 2, 16, 8          # batch, num_nodes, num_timesteps
    Cin, Cout = 4, 8            # in_channels, out_channels

    key = jax.random.PRNGKey(0)
    kx, k1, k2, k3, kb1, kb2, kb3 = jax.random.split(key, 7)

    X = jax.random.normal(kx, (B, N, T, Cin), dtype=jnp.float32)

    # Deterministic synthetic parameters with PyTorch Conv2d shapes.
    wscale = 1.0 / (Cin * KSIZE) ** 0.5
    w1 = jax.random.uniform(k1, (Cout, Cin, 1, KSIZE), jnp.float32, -wscale, wscale)
    w2 = jax.random.uniform(k2, (Cout, Cin, 1, KSIZE), jnp.float32, -wscale, wscale)
    w3 = jax.random.uniform(k3, (Cout, Cin, 1, KSIZE), jnp.float32, -wscale, wscale)
    b1 = jax.random.uniform(kb1, (Cout,), jnp.float32, -wscale, wscale)
    b2 = jax.random.uniform(kb2, (Cout,), jnp.float32, -wscale, wscale)
    b3 = jax.random.uniform(kb3, (Cout,), jnp.float32, -wscale, wscale)

    out = time_block(X, w1, b1, w2, b2, w3, b3)
    out = jax.block_until_ready(out)

    ref = time_block_reference(X, w1, b1, w2, b2, w3, b3)
    assert out.shape == (B, N, T, Cout)
    assert jnp.allclose(out, ref, atol=1e-5, rtol=1e-5), "mismatch vs reference"

    print("KERNEL_OK")
</pallas_src>

<mosaic_0001>
module attributes {stable_mosaic.version = 11 : i64} {
  func.func @timeblock_kernel(%arg0: i32, %arg1: memref<32x40xf32, #tpu.memory_space<vmem>>, %arg2: memref<40x192xf32, #tpu.memory_space<vmem>>, %arg3: memref<1x192xf32, #tpu.memory_space<vmem>>, %arg4: memref<32x64xf32, #tpu.memory_space<vmem>>) attributes {dimension_semantics = [#tpu.dimension_semantics<parallel>], iteration_bounds = array<i64: 1>, scalar_prefetch = 0 : i64, scratch_operands = 0 : i64, tpu.core_type = #tpu.core_type<tc>, window_params = [{transform_indices = @transform_0, window_bounds = array<i64: 32, 40>}, {pipeline_mode = #tpu.pipeline_mode<synchronous>, transform_indices = @transform_1, window_bounds = array<i64: 40, 192>}, {pipeline_mode = #tpu.pipeline_mode<synchronous>, transform_indices = @transform_2, window_bounds = array<i64: 1, 192>}, {transform_indices = @transform_3, window_bounds = array<i64: 32, 64>}]} {
    %c0 = arith.constant 0 : index
    %c0_0 = arith.constant 0 : index
    %0 = vector.load %arg1[%c0, %c0_0] : memref<32x40xf32, #tpu.memory_space<vmem>>, vector<32x40xf32>
    %c0_1 = arith.constant 0 : index
    %c0_2 = arith.constant 0 : index
    %1 = vector.load %arg2[%c0_1, %c0_2] : memref<40x192xf32, #tpu.memory_space<vmem>>, vector<40x192xf32>
    %cst = arith.constant dense<0.000000e+00> : vector<32x192xf32>
    %2 = tpu.matmul %0, %1, %cst {dimension_numbers = #tpu.dot_dimension_numbers<[1], [0], [0], [1], [0, 0, 1, 1], [], []>} : vector<32x40xf32>, vector<40x192xf32>, vector<32x192xf32> -> vector<32x192xf32>
    %c0_3 = arith.constant 0 : index
    %c0_4 = arith.constant 0 : index
    %3 = vector.load %arg3[%c0_3, %c0_4] : memref<1x192xf32, #tpu.memory_space<vmem>>, vector<1x192xf32>
    %4 = vector.broadcast %3 : vector<1x192xf32> to vector<32x192xf32>
    %5 = arith.addf %2, %4 : vector<32x192xf32>
    %6 = vector.extract_strided_slice %5 {offsets = [0, 0], sizes = [32, 64], strides = [1, 1]} : vector<32x192xf32> to vector<32x64xf32>
    %7 = vector.extract_strided_slice %5 {offsets = [0, 64], sizes = [32, 64], strides = [1, 1]} : vector<32x192xf32> to vector<32x64xf32>
    %8 = vector.extract_strided_slice %5 {offsets = [0, 128], sizes = [32, 64], strides = [1, 1]} : vector<32x192xf32> to vector<32x64xf32>
    %9 = arith.negf %7 : vector<32x64xf32>
    %10 = math.exp %9 : vector<32x64xf32>
    %cst_5 = arith.constant 1.000000e+00 : f32
    %11 = vector.broadcast %cst_5 : f32 to vector<32x64xf32>
    %12 = arith.addf %11, %10 : vector<32x64xf32>
    %13 = arith.divf %11, %12 : vector<32x64xf32>
    %14 = arith.addf %6, %13 : vector<32x64xf32>
    %15 = arith.addf %14, %8 : vector<32x64xf32>
    %cst_6 = arith.constant 0.000000e+00 : f32
    %16 = vector.broadcast %cst_6 : f32 to vector<32x64xf32>
    %17 = arith.maximumf %15, %16 : vector<32x64xf32>
    %c0_7 = arith.constant 0 : index
    %c0_8 = arith.constant 0 : index
    %18 = vector.load %arg4[%c0_7, %c0_8] : memref<32x64xf32, #tpu.memory_space<vmem>>, vector<32x64xf32>
    tpu.vector_store %arg4[%c0_7, %c0_8], %17 {strides = array<i32>} : memref<32x64xf32, #tpu.memory_space<vmem>>, vector<32x64xf32>,
    return
  }
  func.func @transform_0(%arg0: i32) -> (i32, i32) {
    %c0_i32 = arith.constant 0 : i32
    %c0_i32_0 = arith.constant 0 : i32
    return %arg0, %c0_i32 : i32, i32
  }
  func.func @transform_1(%arg0: i32) -> (i32, i32) {
    %c0_i32 = arith.constant 0 : i32
    %c0_i32_0 = arith.constant 0 : i32
    %c0_i32_1 = arith.constant 0 : i32
    return %c0_i32, %c0_i32_0 : i32, i32
  }
  func.func @transform_2(%arg0: i32) -> (i32, i32) {
    %c0_i32 = arith.constant 0 : i32
    %c0_i32_0 = arith.constant 0 : i32
    %c0_i32_1 = arith.constant 0 : i32
    return %c0_i32, %c0_i32_0 : i32, i32
  }
  func.func @transform_3(%arg0: i32) -> (i32, i32) {
    %c0_i32 = arith.constant 0 : i32
    %c0_i32_0 = arith.constant 0 : i32
    return %arg0, %c0_i32 : i32, i32
  }
}

</mosaic_0001>

<llo_original>
// kernel: tpu_custom_call.1
$region0: #{tpu_custom_call.1}
  #allocation0 [shape = 'u32[]', space=smem, size = 0x4, offset = 0x4, fixed_abs, tag = 'smem constant byte address 0x4 - core index']
  #allocation1 [shape = 'u32[144,128]{1,0:T(1,128)}', space=vmem, size = 0x12000, scoped, tag = 'internal scratch']
  %s0 = inlined_call_operand.hbm [shape: f32[32,40], index: 0, kind: input, shape index: {}]
  %s1 = inlined_call_operand.hbm [shape: f32[40,192], index: 1, kind: input, shape index: {}]
  %s2 = inlined_call_operand.vmem [shape: f32[1,192], index: 2, kind: input, shape index: {}]
  %s3 = inlined_call_operand.hbm [shape: f32[32,64], index: 3, kind: output, shape index: {}]
  %s4 = sld [smem:[#allocation0]]
  $region30: #{tpu_custom_call.1} parent=0
    _
  %s6 = ssub.s32 1, %s4
  %s7 = scalar_select 0, %s6, %s4
  $region1: #{tpu_custom_call.1} parent=0
    #allocation2 [shape = 'u8[16384]{0}', space=vmem, size = 0x4000, scoped, tag = 'input window, operand 0, single buffered']
    #allocation3 [shape = 's32[1]{0}', space=sflag, size = 0x4, scoped, tag = 'scoped memory for tpu_custom_call.1']
    #allocation4 [shape = 's32[1]{0}', space=sflag, size = 0x4, scoped, tag = 'scoped memory for tpu_custom_call.1']
    #allocation5 [shape = 'u8[40960]{0}', space=vmem, size = 0xa000, scoped, tag = 'input window, operand 1, single buffered']
    #allocation6 [shape = 's32[1]{0}', space=sflag, size = 0x4, scoped, tag = 'scoped memory for tpu_custom_call.1']
    #allocation7 [shape = 'u8[16384]{0}', space=vmem, size = 0x4000, scoped, tag = 'output window, operand 0, single buffered']
    %8 = vsyncpa [#allocation3], 0
    %9 = vsyncpa [#allocation6], 0
    %10 = vsyncpa [#allocation4], 0
    // Predicated region
    $region2: #{tpu_custom_call.1} parent=1 // pred_check
      _
    $region3: #{tpu_custom_call.1} parent=1 // pred_check_branch
      %12 = sbr.rel (0) target = $region5
    $region4: #{tpu_custom_call.1} parent=1 // pred_region
      %s14 = ssub.s32 512, 512
      %15 = vsyncadd [#allocation3], %s14
      %s16 = sshll.u32 [#allocation2], 4
      %s17 = int_to_ptr.vmem [resolvable:$true] %s16
      %22 = dma.hbm_to_vmem [thread:$0]  %s0, 512, %s17, [#allocation3], 128, 128, 8
    $region5: #{tpu_custom_call.1} parent=1 // pred_fallthru
      _
    // Predicated region
    $region6: #{tpu_custom_call.1} parent=1 // pred_check
      _
    $region7: #{tpu_custom_call.1} parent=1 // pred_check_branch
      %24 = sbr.rel (0) target = $region9
    $region8: #{tpu_custom_call.1} parent=1 // pred_region
      %s26 = ssub.s32 1280, 1280
      %27 = vsyncadd [#allocation6], %s26
      %s28 = sshll.u32 [#allocation5], 4
      %s29 = int_to_ptr.vmem [resolvable:$true] %s28
      %34 = dma.hbm_to_vmem [thread:$0]  %s1, 1280, %s29, [#allocation6], 256, 256, 16
    $region9: #{tpu_custom_call.1} parent=1 // pred_fallthru
      _
    // Predicated region
    $region10: #{tpu_custom_call.1} parent=1 // pred_check
      _
    $region11: #{tpu_custom_call.1} parent=1 // pred_check_branch
      %36 = sbr.rel (0) target = $region13
    $region12: #{tpu_custom_call.1} parent=1 // pred_region
      _
    $region13: #{tpu_custom_call.1} parent=1 // pred_fallthru
      _
    // Predicated region
    $region14: #{tpu_custom_call.1} parent=1 // pred_check
      _
    $region15: #{tpu_custom_call.1} parent=1 // pred_check_branch
      %38 = sbr.rel (0) target = $region17
    $region16: #{tpu_custom_call.1} parent=1 // pred_region
      %39 = dma.done [#allocation3], 512
    $region17: #{tpu_custom_call.1} parent=1 // pred_fallthru
      _
    // Predicated region
    $region18: #{tpu_custom_call.1} parent=1 // pred_check
      _
    $region19: #{tpu_custom_call.1} parent=1 // pred_check_branch
      %41 = sbr.rel (0) target = $region21
    $region20: #{tpu_custom_call.1} parent=1 // pred_region
      %42 = dma.done [#allocation6], 1280
    $region21: #{tpu_custom_call.1} parent=1 // pred_fallthru
      _
    %v43 = vld [vmem:[#allocation2] sm:$0xff]
    %v44 = vld [vmem:[#allocation2 + $0x8] sm:$0xff]
    %v45 = vld [vmem:[#allocation2 + $0x10] sm:$0xff]
    %v46 = vld [vmem:[#allocation2 + $0x18] sm:$0xff]
    %v47 = vld [vmem:[#allocation5] sm:$0xff]
    %v48 = vld [vmem:[#allocation5 + $0x8] sm:$0xff]
    %v49 = vld [vmem:[#allocation5 + $0x10] sm:$0xff]
    %v50 = vld [vmem:[#allocation5 + $0x18] sm:$0xff]
    %v51 = vld [vmem:[#allocation5 + $0x20] sm:$0xff]
    %v52 = vld [vmem:[#allocation5 + $0x28] sm:$0xff]
    %v53 = vld [vmem:[#allocation5 + $0x30] sm:$0xff]
    %v54 = vld [vmem:[#allocation5 + $0x38] sm:$0xff]
    %v55 = vld [vmem:[#allocation5 + $0x40] sm:$0xff]
    %v56 = vld [vmem:[#allocation5 + $0x48] sm:$0xff]
    %v57 = vld [vmem:[%s2] sm:$0x3]
    %v59 = vlaneseq
    %v60 = vshrl.u32 %v59, 7
    %v61 = vsub.s32 0, %v60
    %v62 = vrot.slane %v57, %v61
    %v63 = vlaneseq
    %v64 = vshrl.u32 %v63, 7
    %v65 = vsub.s32 1, %v64
    %v66 = vrot.slane %v57, %v65
    %vm69 = vcmask 326656
    %v71 = vsel %vm69, %v43, 0
    %v74 = vsel %vm69, %v44, 0
    %v77 = vsel %vm69, %v45, 0
    %v80 = vsel %vm69, %v46, 0
    %82 = vmatprep.subr.mxu0 0.0
    %83 = vmatpush1.msra.mxu0 0.0
    %84 = vmatprep.subr.mxu0 0.0
    %85 = vmatpush1.msra.mxu0 0.0
    %86 = vmatprep.subr.mxu0 0.0
    %87 = vmatpush1.msra.mxu0 0.0
    %88 = vmatprep.subr.mxu0 0.0
    %89 = vmatpush1.msra.mxu0 0.0
    %90 = vmatprep.subr.mxu0 0.0
    %91 = vmatpush1.msra.mxu0 0.0
    %92 = vmatprep.subr.mxu0 0.0
    %93 = vmatpush1.msra.mxu0 0.0
    %94 = vmatprep.subr.mxu0 0.0
    %95 = vmatpush1.msra.mxu0 0.0
    %96 = vmatprep.subr.mxu0 0.0
    %97 = vmatpush1.msra.mxu0 0.0
    %98 = vmatprep.subr.mxu0 0.0
    %99 = vmatpush1.msra.mxu0 0.0
    %100 = vmatprep.subr.mxu0 0.0
    %101 = vmatpush1.msra.mxu0 0.0
    %102 = vmatprep.subr.mxu0 0.0
    %103 = vmatpush1.msra.mxu0 0.0
    %104 = vmatprep.subr.mxu0 %v56
    %105 = vmatpush1.msra.mxu0 %v55
    %106 = vmatprep.subr.mxu0 %v54
    %107 = vmatpush1.msra.mxu0 %v53
    %108 = vmatprep.subr.mxu0 %v52
    %109 = vmatpush1.msra.mxu0 %v51
    %110 = vmatprep.subr.mxu0 %v50
    %111 = vmatpush1.msra.mxu0 %v49
    %112 = vmatprep.subr.mxu0 %v48
    %113 = vmatpush1.msra.mxu0 %v47
    %114 = vmatprep.subr.mxu0 0.0
    %115 = vmatpush2.msra.mxu0 0.0
    %116 = vmatprep.subr.mxu0 0.0
    %117 = vmatpush2.msra.mxu0 0.0
    %118 = vmatprep.subr.mxu0 0.0
    %119 = vmatpush2.msra.mxu0 0.0
    %120 = vmatprep.subr.mxu0 0.0
    %121 = vmatpush2.msra.mxu0 0.0
    %122 = vmatprep.subr.mxu0 0.0
    %123 = vmatpush2.msra.mxu0 0.0
    %124 = vmatprep.subr.mxu0 0.0
    %125 = vmatpush2.msra.mxu0 0.0
    %126 = vmatprep.subr.mxu0 0.0
    %127 = vmatpush2.msra.mxu0 0.0
    %128 = vmatprep.subr.mxu0 0.0
    %129 = vmatpush2.msra.mxu0 0.0
    %130 = vmatprep.subr.mxu0 0.0
    %131 = vmatpush2.msra.mxu0 0.0
    %132 = vmatprep.subr.mxu0 0.0
    %133 = vmatpush2.msra.mxu0 0.0
    %134 = vmatprep.subr.mxu0 0.0
    %135 = vmatpush2.msra.mxu0 0.0
    %136 = vmatprep.subr.mxu0 0.0
    %137 = vmatpush2.msra.mxu0 0.0
    %138 = vmatprep.subr.mxu0 0.0
    %139 = vmatpush2.msra.mxu0 0.0
    %140 = vmatprep.subr.mxu0 0.0
    %141 = vmatpush2.msra.mxu0 0.0
    %142 = vmatprep.subr.mxu0 0.0
    %143 = vmatpush2.msra.mxu0 0.0
    %144 = vmatprep.subr.mxu0 0.0
    %145 = vmatpush2.msra.mxu0 0.0
    %146 = vmatprep.mubr.f32.mxu0 0.0
    %147 = vmatmul.mubr.f32.gmra.mxu0 %v71
    %v148 = vpop.f32.mrf.mxu0
    %v149 = vadd.f32 %v62, %v148
    %v150 = vpop.f32.mrf.mxu0
    %v151 = vadd.f32 %v66, %v150
    %152 = vmatprep.mubr.f32.mxu0 0.0
    %153 = vmatmul.mubr.f32.gmra.mxu0 %v74
    %v154 = vpop.f32.mrf.mxu0
    %v155 = vadd.f32 %v62, %v154
    %v156 = vpop.f32.mrf.mxu0
    %v157 = vadd.f32 %v66, %v156
    %158 = vmatprep.mubr.f32.mxu0 0.0
    %159 = vmatmul.mubr.f32.gmra.mxu0 %v77
    %v160 = vpop.f32.mrf.mxu0
    %v161 = vadd.f32 %v62, %v160
    %v162 = vpop.f32.mrf.mxu0
    %v163 = vadd.f32 %v66, %v162
    %164 = vmatprep.mubr.f32.mxu0 0.0
    %165 = vmatmul.mubr.f32.gmra.mxu0 %v80
    %v166 = vpop.f32.mrf.mxu0
    %v167 = vadd.f32 %v62, %v166
    %v168 = vpop.f32.mrf.mxu0
    %v169 = vadd.f32 %v66, %v168
    %170 = vdwg.mxu0
    %v171 = vxor.u32 %v149, 2147483648
    %v172 = vxor.u32 %v155, 2147483648
    %v173 = vxor.u32 %v161, 2147483648
    %v174 = vxor.u32 %v167, 2147483648
    %v175 = vmul.f32 %v171, 1.442695
    %v176 = vpow.pop %v175
    %v177 = vmul.f32 %v172, 1.442695
    %v178 = vpow.pop %v177
    %v179 = vmul.f32 %v173, 1.442695
    %v180 = vpow.pop %v179
    %v181 = vmul.f32 %v174, 1.442695
    %v182 = vpow.pop %v181
    %v183 = vadd.f32 %v176, 1.0
    %v184 = vadd.f32 %v178, 1.0
    %v185 = vadd.f32 %v180, 1.0
    %v186 = vadd.f32 %v182, 1.0
    %v187 = vrcp.pop %v183
    %v188 = vmul.f32 1.0, %v187
    %v189 = vrcp.pop %v184
    %v190 = vmul.f32 1.0, %v189
    %v191 = vrcp.pop %v185
    %v192 = vmul.f32 1.0, %v191
    %v193 = vrcp.pop %v186
    %v194 = vmul.f32 1.0, %v193
    %199 = vrot.lane.b32.xlu0 %v188, 64
    %v200 = vpop.permute.xlu0 %199
    %201 = vrot.lane.b32.xlu0 %v190, 64
    %v202 = vpop.permute.xlu0 %201
    %203 = vrot.lane.b32.xlu0 %v192, 64
    %v204 = vpop.permute.xlu0 %203
    %205 = vrot.lane.b32.xlu0 %v194, 64
    %v206 = vpop.permute.xlu0 %205
    %v211 = vadd.f32 %v149, %v200
    %v212 = vadd.f32 %v155, %v202
    %v213 = vadd.f32 %v161, %v204
    %v214 = vadd.f32 %v167, %v206
    %v215 = vadd.f32 %v211, %v151
    %v216 = vadd.f32 %v212, %v157
    %v217 = vadd.f32 %v213, %v163
    %v218 = vadd.f32 %v214, %v169
    %v219 = vmax.f32 %v215, 0.0
    %v220 = vmax.f32 %v216, 0.0
    %v221 = vmax.f32 %v217, 0.0
    %v222 = vmax.f32 %v218, 0.0
    %vm223 = vcmask 523264
    %224 = vst.msk [vmem:[#allocation7] sm:$0xff] %vm223, %v219
    %225 = vst.msk [vmem:[#allocation7 + $0x8] sm:$0xff] %vm223, %v220
    %226 = vst.msk [vmem:[#allocation7 + $0x10] sm:$0xff] %vm223, %v221
    %227 = vst.msk [vmem:[#allocation7 + $0x18] sm:$0xff] %vm223, %v222
    // Predicated region
    $region22: #{tpu_custom_call.1} parent=1 // pred_check
      _
    $region23: #{tpu_custom_call.1} parent=1 // pred_check_branch
      %229 = sbr.rel (0) target = $region25
    $region24: #{tpu_custom_call.1} parent=1 // pred_region
      %s231 = ssub.s32 512, 512
      %232 = vsyncadd [#allocation4], %s231
      %s233 = sshll.u32 [#allocation7], 4
      %s234 = int_to_ptr.vmem [resolvable:$true] %s233
      %239 = dma.vmem_to_hbm [thread:$0]  %s234, 512, %s3, [#allocation4], 128, 128, 8
    $region25: #{tpu_custom_call.1} parent=1 // pred_fallthru
      _
    // Predicated region
    $region26: #{tpu_custom_call.1} parent=1 // pred_check
      _
    $region27: #{tpu_custom_call.1} parent=1 // pred_check_branch
      %241 = sbr.rel (0) target = $region29
    $region28: #{tpu_custom_call.1} parent=1 // pred_region
      %242 = dma.done [#allocation4], 512
    $region29: #{tpu_custom_call.1} parent=1 // pred_fallthru
      _
    %243 = vsyncpa [#allocation3], 1
    %244 = vsyncpa [#allocation6], 1
    %245 = vsyncpa [#allocation4], 1

</llo_original>
